<compile_context>
chip_gen: v7x
topology: tpu7x:2x2x1
jax: 0.10.0
libtpu: 0.0.40
codegen_flags: <defaults>
</compile_context>

<pallas_src>
import jax
import jax.numpy as jnp
from jax.experimental import pallas as pl
from jax.experimental.pallas import tpu as pltpu


def _round_up(n, m):
    return (n + m - 1) // m * m


def _pick_tile_n(c_out_pad):
    # Biggest convenient lane-dense tile that evenly divides the padded width;
    # >= 256 keeps per-grid-step overhead (~0.35 us) negligible at real sizes.
    for tn in (512, 256, 128):
        if c_out_pad % tn == 0:
            return tn
    return 128


def _to_weights_dtype_kernel(x_ref, w1_ref, b1_ref, w2_ref, b2_ref, o_ref):
    # Linear 1 + SiLU (recomputed per column tile; negligible FLOPs, hidden
    # behind the W2 tile DMA).
    h = jnp.dot(x_ref[...], w1_ref[...], preferred_element_type=jnp.float32)
    h = h + b1_ref[...]
    h = h * jax.nn.sigmoid(h)
    # Linear 2 on this column tile: bf16 x bf16 -> f32 accumulate on the MXU.
    y = jnp.dot(h.astype(w2_ref.dtype), w2_ref[...],
                preferred_element_type=jnp.float32)
    y = y + b2_ref[...]
    # ToWeightsDType: cast to the weights dtype on the store.
    o_ref[...] = y.astype(o_ref.dtype)


def to_weights_dtype_forward(x, w1, b1, w2, b2, *, out_dtype=jnp.bfloat16):
    """Pallas implementation of ToWeightsDType(TimestepEmbedding(...), dtype)."""
    B, c_in = x.shape
    hid = w1.shape[1]
    c_out = w2.shape[1]

    # HBM-bound: ship matmul inputs as bf16 (native MXU input on v5e/v6e/v7x).
    # Biases stay f32 and add onto the f32 accumulator (negligible bytes).
    wdt = jnp.bfloat16
    xb = x.astype(wdt)
    w1b = w1.astype(wdt)
    w2b = w2.astype(wdt)
    b1f = b1.reshape(1, hid).astype(jnp.float32)
    b2f = b2.reshape(1, c_out).astype(jnp.float32)

    # Pad batch to a sublane-full bf16 output tile (16 rows) and the output
    # columns to a lane-dense multiple of 128 so stores are unmasked.
    b_pad = _round_up(max(B, 16), 16)
    c_out_pad = _round_up(c_out, 128)
    if b_pad != B:
        xb = jnp.pad(xb, ((0, b_pad - B), (0, 0)))
    if c_out_pad != c_out:
        w2b = jnp.pad(w2b, ((0, 0), (0, c_out_pad - c_out)))
        b2f = jnp.pad(b2f, ((0, 0), (0, c_out_pad - c_out)))

    tn = _pick_tile_n(c_out_pad)
    grid = (c_out_pad // tn,)

    out_pad = pl.pallas_call(
        _to_weights_dtype_kernel,
        out_shape=jax.ShapeDtypeStruct((b_pad, c_out_pad), out_dtype),
        grid=grid,
        in_specs=[
            # x, W1, b1 stay VMEM-resident across the whole grid.
            pl.BlockSpec((b_pad, c_in), lambda j: (0, 0)),
            pl.BlockSpec((c_in, hid), lambda j: (0, 0)),
            pl.BlockSpec((1, hid), lambda j: (0, 0)),
            # W2 / b2 are tiled along the output column axis: the dominant W2
            # DMA is double-buffered and pipelined against compute/stores.
            pl.BlockSpec((hid, tn), lambda j: (0, j)),
            pl.BlockSpec((1, tn), lambda j: (0, j)),
        ],
        out_specs=pl.BlockSpec((b_pad, tn), lambda j: (0, j)),
        compiler_params=pltpu.CompilerParams(
            # Column tiles are independent -> shard across v7x's 2 TensorCores.
            dimension_semantics=("parallel",)),
    )(xb, w1b, b1f, w2b, b2f)

    return out_pad[:B, :c_out]


if __name__ == "__main__":
    # Small shapes consistent with the module (real model: 16 -> 1280 -> 1280).
    # C_OUT=256 with TN=128 exercises the tiled (2-step) grid path.
    B, C_IN, HID, C_OUT = 8, 16, 128, 256

    key = jax.random.PRNGKey(0)
    kx, k1, k2, k3, k4 = jax.random.split(key, 5)

    x = jax.random.normal(kx, (B, C_IN), dtype=jnp.float32)
    w1 = jax.random.normal(k1, (C_IN, HID), dtype=jnp.float32) * 0.1
    b1 = jax.random.normal(k2, (1, HID), dtype=jnp.float32) * 0.01
    w2 = jax.random.normal(k3, (HID, C_OUT), dtype=jnp.float32) * 0.1
    b2 = jax.random.normal(k4, (1, C_OUT), dtype=jnp.float32) * 0.01

    out = to_weights_dtype_forward(x, w1, b1, w2, b2, out_dtype=jnp.bfloat16)
    out = jax.block_until_ready(out)

    # Pure-JAX reference of module(x).to(dtype).
    h_ref = x @ w1 + b1
    h_ref = h_ref * jax.nn.sigmoid(h_ref)
    ref = (h_ref @ w2 + b2).astype(jnp.bfloat16)

    assert out.shape == (B, C_OUT) and out.dtype == jnp.bfloat16
    err = jnp.max(jnp.abs(out.astype(jnp.float32) - ref.astype(jnp.float32)))
    assert jnp.allclose(out.astype(jnp.float32), ref.astype(jnp.float32),
                        atol=5e-2, rtol=5e-2), float(err)
    print("KERNEL_OK")
</pallas_src>

<mosaic_0001>
module attributes {stable_mosaic.version = 11 : i64} {
  func.func @_to_weights_dtype_kernel(%arg0: i32, %arg1: memref<16x16xbf16, #tpu.memory_space<vmem>>, %arg2: memref<16x128xbf16, #tpu.memory_space<vmem>>, %arg3: memref<1x128xf32, #tpu.memory_space<vmem>>, %arg4: memref<128x256xbf16, #tpu.memory_space<vmem>>, %arg5: memref<1x256xf32, #tpu.memory_space<vmem>>, %arg6: memref<16x256xbf16, #tpu.memory_space<vmem>>) attributes {dimension_semantics = [#tpu.dimension_semantics<parallel>], iteration_bounds = array<i64: 1>, scalar_prefetch = 0 : i64, scratch_operands = 0 : i64, tpu.core_type = #tpu.core_type<tc>, window_params = [{pipeline_mode = #tpu.pipeline_mode<synchronous>, transform_indices = @transform_0, window_bounds = array<i64: 16, 16>}, {pipeline_mode = #tpu.pipeline_mode<synchronous>, transform_indices = @transform_1, window_bounds = array<i64: 16, 128>}, {pipeline_mode = #tpu.pipeline_mode<synchronous>, transform_indices = @transform_2, window_bounds = array<i64: 1, 128>}, {transform_indices = @transform_3, window_bounds = array<i64: 128, 256>}, {transform_indices = @transform_4, window_bounds = array<i64: 1, 256>}, {transform_indices = @transform_5, window_bounds = array<i64: 16, 256>}]} {
    %c0 = arith.constant 0 : index
    %c0_0 = arith.constant 0 : index
    %0 = vector.load %arg1[%c0, %c0_0] : memref<16x16xbf16, #tpu.memory_space<vmem>>, vector<16x16xbf16>
    %c0_1 = arith.constant 0 : index
    %c0_2 = arith.constant 0 : index
    %1 = vector.load %arg2[%c0_1, %c0_2] : memref<16x128xbf16, #tpu.memory_space<vmem>>, vector<16x128xbf16>
    %cst = arith.constant dense<0.000000e+00> : vector<16x128xf32>
    %2 = tpu.matmul %0, %1, %cst {dimension_numbers = #tpu.dot_dimension_numbers<[1], [0], [0], [1], [0, 0, 1, 1], [], []>} : vector<16x16xbf16>, vector<16x128xbf16>, vector<16x128xf32> -> vector<16x128xf32>
    %c0_3 = arith.constant 0 : index
    %c0_4 = arith.constant 0 : index
    %3 = vector.load %arg3[%c0_3, %c0_4] : memref<1x128xf32, #tpu.memory_space<vmem>>, vector<1x128xf32>
    %4 = vector.broadcast %3 : vector<1x128xf32> to vector<16x128xf32>
    %5 = arith.addf %2, %4 : vector<16x128xf32>
    %6 = arith.negf %5 : vector<16x128xf32>
    %7 = math.exp %6 : vector<16x128xf32>
    %cst_5 = arith.constant 1.000000e+00 : f32
    %8 = vector.broadcast %cst_5 : f32 to vector<16x128xf32>
    %9 = arith.addf %8, %7 : vector<16x128xf32>
    %10 = arith.divf %8, %9 : vector<16x128xf32>
    %11 = arith.mulf %5, %10 : vector<16x128xf32>
    %12 = arith.truncf %11 : vector<16x128xf32> to vector<16x128xbf16>
    %c0_6 = arith.constant 0 : index
    %c0_7 = arith.constant 0 : index
    %13 = vector.load %arg4[%c0_6, %c0_7] : memref<128x256xbf16, #tpu.memory_space<vmem>>, vector<128x256xbf16>
    %cst_8 = arith.constant dense<0.000000e+00> : vector<16x256xf32>
    %14 = tpu.matmul %12, %13, %cst_8 {dimension_numbers = #tpu.dot_dimension_numbers<[1], [0], [0], [1], [0, 0, 1, 1], [], []>} : vector<16x128xbf16>, vector<128x256xbf16>, vector<16x256xf32> -> vector<16x256xf32>
    %c0_9 = arith.constant 0 : index
    %c0_10 = arith.constant 0 : index
    %15 = vector.load %arg5[%c0_9, %c0_10] : memref<1x256xf32, #tpu.memory_space<vmem>>, vector<1x256xf32>
    %16 = vector.broadcast %15 : vector<1x256xf32> to vector<16x256xf32>
    %17 = arith.addf %14, %16 : vector<16x256xf32>
    %18 = arith.truncf %17 : vector<16x256xf32> to vector<16x256xbf16>
    %c0_11 = arith.constant 0 : index
    %c0_12 = arith.constant 0 : index
    %19 = vector.load %arg6[%c0_11, %c0_12] : memref<16x256xbf16, #tpu.memory_space<vmem>>, vector<16x256xbf16>
    tpu.vector_store %arg6[%c0_11, %c0_12], %18 {strides = array<i32>} : memref<16x256xbf16, #tpu.memory_space<vmem>>, vector<16x256xbf16>,
    return
  }
  func.func @transform_0(%arg0: i32) -> (i32, i32) {
    %c0_i32 = arith.constant 0 : i32
    %c0_i32_0 = arith.constant 0 : i32
    %c0_i32_1 = arith.constant 0 : i32
    return %c0_i32, %c0_i32_0 : i32, i32
  }
  func.func @transform_1(%arg0: i32) -> (i32, i32) {
    %c0_i32 = arith.constant 0 : i32
    %c0_i32_0 = arith.constant 0 : i32
    %c0_i32_1 = arith.constant 0 : i32
    return %c0_i32, %c0_i32_0 : i32, i32
  }
  func.func @transform_2(%arg0: i32) -> (i32, i32) {
    %c0_i32 = arith.constant 0 : i32
    %c0_i32_0 = arith.constant 0 : i32
    %c0_i32_1 = arith.constant 0 : i32
    return %c0_i32, %c0_i32_0 : i32, i32
  }
  func.func @transform_3(%arg0: i32) -> (i32, i32) {
    %c0_i32 = arith.constant 0 : i32
    %c0_i32_0 = arith.constant 0 : i32
    return %c0_i32, %arg0 : i32, i32
  }
  func.func @transform_4(%arg0: i32) -> (i32, i32) {
    %c0_i32 = arith.constant 0 : i32
    %c0_i32_0 = arith.constant 0 : i32
    return %c0_i32, %arg0 : i32, i32
  }
  func.func @transform_5(%arg0: i32) -> (i32, i32) {
    %c0_i32 = arith.constant 0 : i32
    %c0_i32_0 = arith.constant 0 : i32
    return %c0_i32, %arg0 : i32, i32
  }
}

</mosaic_0001>

<llo_original>
// kernel: tpu_custom_call.1
$region0: #{tpu_custom_call.1}
  #allocation0 [shape = 'u32[]', space=smem, size = 0x4, offset = 0x4, fixed_abs, tag = 'smem constant byte address 0x4 - core index']
  #allocation1 [shape = 'u32[144,128]{1,0:T(1,128)}', space=vmem, size = 0x12000, scoped, tag = 'internal scratch']
  %s0 = inlined_call_operand.hbm [shape: bf16[16,16], index: 0, kind: input, shape index: {}]
  %s1 = inlined_call_operand.hbm [shape: bf16[16,128], index: 1, kind: input, shape index: {}]
  %s2 = inlined_call_operand.vmem [shape: f32[1,128], index: 2, kind: input, shape index: {}]
  %s3 = inlined_call_operand.hbm [shape: bf16[128,256], index: 3, kind: input, shape index: {}]
  %s4 = inlined_call_operand.vmem [shape: f32[1,256], index: 4, kind: input, shape index: {}]
  %s5 = inlined_call_operand.hbm [shape: bf16[16,256], index: 5, kind: output, shape index: {}]
  %s6 = sld [smem:[#allocation0]]
  $region42: #{tpu_custom_call.1} parent=0
    _
  %s8 = ssub.s32 1, %s6
  %s9 = scalar_select 0, %s8, %s6
  $region1: #{tpu_custom_call.1} parent=0
    #allocation2 [shape = 'u8[4096]{0}', space=vmem, size = 0x1000, scoped, tag = 'input window, operand 0, single buffered']
    #allocation3 [shape = 's32[1]{0}', space=sflag, size = 0x4, scoped, tag = 'scoped memory for tpu_custom_call.1']
    #allocation4 [shape = 's32[1]{0}', space=sflag, size = 0x4, scoped, tag = 'scoped memory for tpu_custom_call.1']
    #allocation5 [shape = 'u8[4096]{0}', space=vmem, size = 0x1000, scoped, tag = 'input window, operand 1, single buffered']
    #allocation6 [shape = 's32[1]{0}', space=sflag, size = 0x4, scoped, tag = 'scoped memory for tpu_custom_call.1']
    #allocation7 [shape = 'u8[65536]{0}', space=vmem, size = 0x10000, scoped, tag = 'input window, operand 3, single buffered']
    #allocation8 [shape = 'u8[8192]{0}', space=vmem, size = 0x2000, scoped, tag = 'output window, operand 0, single buffered']
    %10 = vsyncpa [#allocation3], 0
    %11 = vsyncpa [#allocation6], 0
    %12 = vsyncpa [#allocation4], 0
    // Predicated region
    $region2: #{tpu_custom_call.1} parent=1 // pred_check
      _
    $region3: #{tpu_custom_call.1} parent=1 // pred_check_branch
      %14 = sbr.rel (0) target = $region5
    $region4: #{tpu_custom_call.1} parent=1 // pred_region
      %s16 = ssub.s32 128, 128
      %17 = vsyncadd [#allocation3], %s16
      %s18 = sshll.u32 [#allocation2], 4
      %s19 = int_to_ptr.vmem [resolvable:$true] %s18
      %24 = dma.hbm_to_vmem [thread:$0]  %s0, 128, %s19, [#allocation3], 64, 64, 4
    $region5: #{tpu_custom_call.1} parent=1 // pred_fallthru
      _
    // Predicated region
    $region6: #{tpu_custom_call.1} parent=1 // pred_check
      _
    $region7: #{tpu_custom_call.1} parent=1 // pred_check_branch
      %26 = sbr.rel (0) target = $region9
    $region8: #{tpu_custom_call.1} parent=1 // pred_region
      %s28 = ssub.s32 128, 128
      %29 = vsyncadd [#allocation6], %s28
      %s30 = sshll.u32 [#allocation5], 4
      %s31 = int_to_ptr.vmem [resolvable:$true] %s30
      %36 = dma.hbm_to_vmem [thread:$0]  %s1, 128, %s31, [#allocation6], 64, 64, 4
    $region9: #{tpu_custom_call.1} parent=1 // pred_fallthru
      _
    // Predicated region
    $region10: #{tpu_custom_call.1} parent=1 // pred_check
      _
    $region11: #{tpu_custom_call.1} parent=1 // pred_check_branch
      %38 = sbr.rel (0) target = $region13
    $region12: #{tpu_custom_call.1} parent=1 // pred_region
      _
    $region13: #{tpu_custom_call.1} parent=1 // pred_fallthru
      _
    // Predicated region
    $region14: #{tpu_custom_call.1} parent=1 // pred_check
      _
    $region15: #{tpu_custom_call.1} parent=1 // pred_check_branch
      %40 = sbr.rel (0) target = $region17
    $region16: #{tpu_custom_call.1} parent=1 // pred_region
      %s42 = ssub.s32 2048, 2048
      %43 = vsyncadd [#allocation6], %s42
      %s44 = sshll.u32 [#allocation7], 4
      %s45 = int_to_ptr.vmem [resolvable:$true] %s44
      %50 = dma.hbm_to_vmem [thread:$0]  %s3, 2048, %s45, [#allocation6], 128, 128, 8
    $region17: #{tpu_custom_call.1} parent=1 // pred_fallthru
      _
    // Predicated region
    $region18: #{tpu_custom_call.1} parent=1 // pred_check
      _
    $region19: #{tpu_custom_call.1} parent=1 // pred_check_branch
      %52 = sbr.rel (0) target = $region21
    $region20: #{tpu_custom_call.1} parent=1 // pred_region
      _
    $region21: #{tpu_custom_call.1} parent=1 // pred_fallthru
      _
    // Predicated region
    $region22: #{tpu_custom_call.1} parent=1 // pred_check
      _
    $region23: #{tpu_custom_call.1} parent=1 // pred_check_branch
      %54 = sbr.rel (0) target = $region25
    $region24: #{tpu_custom_call.1} parent=1 // pred_region
      %55 = dma.done [#allocation3], 128
    $region25: #{tpu_custom_call.1} parent=1 // pred_fallthru
      _
    // Predicated region
    $region26: #{tpu_custom_call.1} parent=1 // pred_check
      _
    $region27: #{tpu_custom_call.1} parent=1 // pred_check_branch
      %57 = sbr.rel (0) target = $region29
    $region28: #{tpu_custom_call.1} parent=1 // pred_region
      %58 = dma.done [#allocation6], 128
    $region29: #{tpu_custom_call.1} parent=1 // pred_fallthru
      _
    // Predicated region
    $region30: #{tpu_custom_call.1} parent=1 // pred_check
      _
    $region31: #{tpu_custom_call.1} parent=1 // pred_check_branch
      %60 = sbr.rel (0) target = $region33
    $region32: #{tpu_custom_call.1} parent=1 // pred_region
      %61 = dma.done [#allocation6], 2048
    $region33: #{tpu_custom_call.1} parent=1 // pred_fallthru
      _
    %v63 = vld [vmem:[#allocation2] sm:$0xf]
    %v64 = vld [vmem:[#allocation2 + $0x4] sm:$0xf]
    %v65 = vld [vmem:[#allocation5] sm:$0xf]
    %v66 = vld [vmem:[#allocation5 + $0x4] sm:$0xf]
    %v67 = vld [vmem:[%s2] sm:$0x1]
    %v69 = vlaneseq
    %v70 = vshrl.u32 %v69, 7
    %v71 = vsub.s32 0, %v70
    %v72 = vrot.slane %v67, %v71
    %v76 = vunpack.c.l.b16 %v63
    %v77 = vunpack.c.l.b16 %v64
    %v78 = vpack.c.b16 %v77, %v76
    %v81 = vunpack.c.l.b16 %v65
    %v82 = vunpack.c.l.b16 %v66
    %v83 = vpack.c.b16 %v82, %v81
    %vm85 = vcmask 130048
    %v87 = vsel %vm85, %v78, 0
    %89 = vmatprep.subr.bf16.mxu0 0
    %90 = vmatpush1.bf16.msra.mxu0 %v83
    %91 = vmatprep.subr.bf16.mxu0 0
    %92 = vmatpush1.bf16.msra.mxu0 0
    %93 = vmatprep.subr.bf16.mxu0 0
    %94 = vmatpush1.bf16.msra.mxu0 0
    %95 = vmatprep.subr.bf16.mxu0 0
    %96 = vmatpush1.bf16.msra.mxu0 0
    %97 = vmatprep.subr.bf16.mxu0 0
    %98 = vmatpush1.bf16.msra.mxu0 0
    %99 = vmatprep.subr.bf16.mxu0 0
    %100 = vmatpush1.bf16.msra.mxu0 0
    %101 = vmatprep.subr.bf16.mxu0 0
    %102 = vmatpush1.bf16.msra.mxu0 0
    %103 = vmatprep.subr.bf16.mxu0 0
    %104 = vmatpush1.bf16.msra.mxu0 0
    %105 = vmatprep.subr.bf16.mxu0 0
    %106 = vmatpush1.bf16.msra.mxu0 0
    %107 = vmatprep.subr.bf16.mxu0 0
    %108 = vmatpush1.bf16.msra.mxu0 0
    %109 = vmatprep.subr.bf16.mxu0 0
    %110 = vmatpush1.bf16.msra.mxu0 0
    %111 = vmatprep.subr.bf16.mxu0 0
    %112 = vmatpush1.bf16.msra.mxu0 0
    %113 = vmatprep.subr.bf16.mxu0 0
    %114 = vmatpush1.bf16.msra.mxu0 0
    %115 = vmatprep.subr.bf16.mxu0 0
    %116 = vmatpush1.bf16.msra.mxu0 0
    %117 = vmatprep.subr.bf16.mxu0 0
    %118 = vmatpush1.bf16.msra.mxu0 0
    %119 = vmatprep.subr.bf16.mxu0 0
    %120 = vmatpush1.bf16.msra.mxu0 0
    %121 = vmatprep.mubr.bf16.mxu0 0
    %122 = vmatmul.mubr.bf16.gmra.mrb[0].mxu0 %v87
    %v123 = vpop.f32.mrb[0].mxu0
    %v124 = vadd.f32 %v72, %v123
    %v125 = vpop.f32.mrb[0].mxu0
    %v126 = vpop.f32.mrb[0].mxu0
    %v127 = vadd.f32 %v72, %v126
    %v128 = vpop.f32.mrb[0].mxu0
    %129 = vdwg.mxu0
    %v130 = vxor.u32 %v124, 2147483648
    %v131 = vxor.u32 %v127, 2147483648
    %v132 = vmul.f32 %v130, 1.442695
    %v133 = vpow.pop %v132
    %v134 = vmul.f32 %v131, 1.442695
    %v135 = vpow.pop %v134
    %v136 = vadd.f32 %v133, 1.0
    %v137 = vadd.f32 %v135, 1.0
    %v138 = vrcp.pop %v136
    %v139 = vmul.f32 1.0, %v138
    %v140 = vrcp.pop %v137
    %v141 = vmul.f32 1.0, %v140
    %v142 = vmul.f32 %v124, %v139
    %v143 = vmul.f32 %v127, %v141
    %v144 = vpack.c.bf16 %v143, %v142
    %v145 = vld [vmem:[#allocation7] sm:$0xff]
    %v146 = vld [vmem:[#allocation7 + $0x8] sm:$0xff]
    %v147 = vld [vmem:[#allocation7 + $0x10] sm:$0xff]
    %v148 = vld [vmem:[#allocation7 + $0x18] sm:$0xff]
    %v149 = vld [vmem:[#allocation7 + $0x20] sm:$0xff]
    %v150 = vld [vmem:[#allocation7 + $0x28] sm:$0xff]
    %v151 = vld [vmem:[#allocation7 + $0x30] sm:$0xff]
    %v152 = vld [vmem:[#allocation7 + $0x38] sm:$0xff]
    %v153 = vld [vmem:[#allocation7 + $0x40] sm:$0xff]
    %v154 = vld [vmem:[#allocation7 + $0x48] sm:$0xff]
    %v155 = vld [vmem:[#allocation7 + $0x50] sm:$0xff]
    %v156 = vld [vmem:[#allocation7 + $0x58] sm:$0xff]
    %v157 = vld [vmem:[#allocation7 + $0x60] sm:$0xff]
    %v158 = vld [vmem:[#allocation7 + $0x68] sm:$0xff]
    %v159 = vld [vmem:[#allocation7 + $0x70] sm:$0xff]
    %v160 = vld [vmem:[#allocation7 + $0x78] sm:$0xff]
    %v161 = vld [vmem:[%s4] sm:$0x3]
    %v163 = vlaneseq
    %v164 = vshrl.u32 %v163, 7
    %v165 = vsub.s32 0, %v164
    %v166 = vrot.slane %v161, %v165
    %v167 = vlaneseq
    %v168 = vshrl.u32 %v167, 7
    %v169 = vsub.s32 1, %v168
    %v170 = vrot.slane %v161, %v169
    %v189 = vunpack.c.l.b16 %v145
    %v190 = vunpack.c.h.b16 %v145
    %v191 = vunpack.c.l.b16 %v146
    %v192 = vunpack.c.h.b16 %v146
    %v193 = vunpack.c.l.b16 %v147
    %v194 = vunpack.c.h.b16 %v147
    %v195 = vunpack.c.l.b16 %v148
    %v196 = vunpack.c.h.b16 %v148
    %v197 = vunpack.c.l.b16 %v149
    %v198 = vunpack.c.h.b16 %v149
    %v199 = vunpack.c.l.b16 %v150
    %v200 = vunpack.c.h.b16 %v150
    %v201 = vunpack.c.l.b16 %v151
    %v202 = vunpack.c.h.b16 %v151
    %v203 = vunpack.c.l.b16 %v152
    %v204 = vunpack.c.h.b16 %v152
    %v205 = vunpack.c.l.b16 %v153
    %v206 = vunpack.c.h.b16 %v153
    %v207 = vunpack.c.l.b16 %v154
    %v208 = vunpack.c.h.b16 %v154
    %v209 = vunpack.c.l.b16 %v155
    %v210 = vunpack.c.h.b16 %v155
    %v211 = vunpack.c.l.b16 %v156
    %v212 = vunpack.c.h.b16 %v156
    %v213 = vunpack.c.l.b16 %v157
    %v214 = vunpack.c.h.b16 %v157
    %v215 = vunpack.c.l.b16 %v158
    %v216 = vunpack.c.h.b16 %v158
    %v217 = vunpack.c.l.b16 %v159
    %v218 = vunpack.c.h.b16 %v159
    %v219 = vunpack.c.l.b16 %v160
    %v220 = vunpack.c.h.b16 %v160
    %v221 = vpack.c.b16 %v191, %v189
    %v222 = vpack.c.b16 %v192, %v190
    %v223 = vpack.c.b16 %v195, %v193
    %v224 = vpack.c.b16 %v196, %v194
    %v225 = vpack.c.b16 %v199, %v197
    %v226 = vpack.c.b16 %v200, %v198
    %v227 = vpack.c.b16 %v203, %v201
    %v228 = vpack.c.b16 %v204, %v202
    %v229 = vpack.c.b16 %v207, %v205
    %v230 = vpack.c.b16 %v208, %v206
    %v231 = vpack.c.b16 %v211, %v209
    %v232 = vpack.c.b16 %v212, %v210
    %v233 = vpack.c.b16 %v215, %v213
    %v234 = vpack.c.b16 %v216, %v214
    %v235 = vpack.c.b16 %v219, %v217
    %v236 = vpack.c.b16 %v220, %v218
    %253 = vmatprep.subr.bf16.mxu0 %v222
    %254 = vmatpush1.bf16.msra.mxu0 %v221
    %255 = vmatprep.subr.bf16.mxu0 %v224
    %256 = vmatpush1.bf16.msra.mxu0 %v223
    %257 = vmatprep.subr.bf16.mxu0 %v226
    %258 = vmatpush1.bf16.msra.mxu0 %v225
    %259 = vmatprep.subr.bf16.mxu0 %v228
    %260 = vmatpush1.bf16.msra.mxu0 %v227
    %261 = vmatprep.subr.bf16.mxu0 %v230
    %262 = vmatpush1.bf16.msra.mxu0 %v229
    %263 = vmatprep.subr.bf16.mxu0 %v232
    %264 = vmatpush1.bf16.msra.mxu0 %v231
    %265 = vmatprep.subr.bf16.mxu0 %v234
    %266 = vmatpush1.bf16.msra.mxu0 %v233
    %267 = vmatprep.subr.bf16.mxu0 %v236
    %268 = vmatpush1.bf16.msra.mxu0 %v235
    %269 = vmatprep.subr.bf16.mxu0 0
    %270 = vmatpush1.bf16.msra.mxu0 0
    %271 = vmatprep.subr.bf16.mxu0 0
    %272 = vmatpush1.bf16.msra.mxu0 0
    %273 = vmatprep.subr.bf16.mxu0 0
    %274 = vmatpush1.bf16.msra.mxu0 0
    %275 = vmatprep.subr.bf16.mxu0 0
    %276 = vmatpush1.bf16.msra.mxu0 0
    %277 = vmatprep.subr.bf16.mxu0 0
    %278 = vmatpush1.bf16.msra.mxu0 0
    %279 = vmatprep.subr.bf16.mxu0 0
    %280 = vmatpush1.bf16.msra.mxu0 0
    %281 = vmatprep.subr.bf16.mxu0 0
    %282 = vmatpush1.bf16.msra.mxu0 0
    %283 = vmatprep.subr.bf16.mxu0 0
    %284 = vmatpush1.bf16.msra.mxu0 0
    %285 = vmatprep.mubr.bf16.mxu0 0
    %286 = vmatmul.mubr.bf16.gmra.mrb[0].mxu0 %v144
    %v287 = vpop.f32.mrb[0].mxu0
    %v288 = vadd.f32 %v166, %v287
    %v289 = vpop.f32.mrb[0].mxu0
    %v290 = vadd.f32 %v170, %v289
    %v291 = vpop.f32.mrb[0].mxu0
    %v292 = vadd.f32 %v166, %v291
    %v293 = vpop.f32.mrb[0].mxu0
    %v294 = vadd.f32 %v170, %v293
    %295 = vdwg.mxu0
    %v296 = vpack.c.bf16 %v292, %v288
    %v297 = vpack.c.bf16 %v294, %v290
    %v300 = vunpack.c.l.b16 %v296
    %v301 = vunpack.c.l.b16 %v297
    %v302 = vunpack.c.h.b16 %v296
    %v303 = vunpack.c.h.b16 %v297
    %v304 = vpack.c.b16 %v301, %v300
    %v305 = vpack.c.b16 %v303, %v302
    %308 = vst [vmem:[#allocation8] sm:$0xff] %v304
    %309 = vst [vmem:[#allocation8 + $0x8] sm:$0xff] %v305
    // Predicated region
    $region34: #{tpu_custom_call.1} parent=1 // pred_check
      _
    $region35: #{tpu_custom_call.1} parent=1 // pred_check_branch
      %311 = sbr.rel (0) target = $region37
    $region36: #{tpu_custom_call.1} parent=1 // pred_region
      %s313 = ssub.s32 256, 256
      %314 = vsyncadd [#allocation4], %s313
      %s315 = sshll.u32 [#allocation8], 4
      %s316 = int_to_ptr.vmem [resolvable:$true] %s315
      %321 = dma.vmem_to_hbm [thread:$0]  %s316, 256, %s5, [#allocation4], 128, 128, 8
    $region37: #{tpu_custom_call.1} parent=1 // pred_fallthru
      _
    // Predicated region
    $region38: #{tpu_custom_call.1} parent=1 // pred_check
      _
    $region39: #{tpu_custom_call.1} parent=1 // pred_check_branch
      %323 = sbr.rel (0) target = $region41
    $region40: #{tpu_custom_call.1} parent=1 // pred_region
      %324 = dma.done [#allocation4], 256
    $region41: #{tpu_custom_call.1} parent=1 // pred_fallthru
      _
    %325 = vsyncpa [#allocation3], 1
    %326 = vsyncpa [#allocation6], 1
    %327 = vsyncpa [#allocation4], 1

</llo_original>
